<compile_context>
chip_gen: v7x
topology: tpu7x:2x2x1
jax: 0.10.0
libtpu: 0.0.40
codegen_flags: <defaults>
</compile_context>

<pallas_src>
import functools

import jax
import jax.numpy as jnp
from jax.experimental import pallas as pl
from jax.experimental.pallas import tpu as pltpu

_NEG_BIG = -1.0e30            # finite stand-in for -inf (avoids inf-inf -> NaN)
_IGNORE_INDEX = -100          # nn.CrossEntropyLoss default


def _round_up(x, m):
    return (x + m - 1) // m * m


def _ce_kernel(labels_ref, logits_ref, loss_ref, m_sc, s_sc, t_sc,
               *, num_classes, tile_c):
    """One (TN, TC) logits tile: online LSE + target-logit accumulation."""
    k = pl.program_id(1)

    @pl.when(k == 0)
    def _init():
        m_sc[...] = jnp.full_like(m_sc, _NEG_BIG)
        s_sc[...] = jnp.zeros_like(s_sc)
        t_sc[...] = jnp.zeros_like(t_sc)

    labels = labels_ref[...]                                   # (TN, 1) int32
    x = logits_ref[...].astype(jnp.float32)                    # (TN, TC)

    # Global class index of each lane in this tile; mask lanes past the true C
    # (class-dimension padding) so they contribute 0 to the sum-exp.
    col = jax.lax.broadcasted_iota(jnp.int32, x.shape, 1) + k * tile_c
    xm = jnp.where(col < num_classes, x, _NEG_BIG)

    # Online log-sum-exp update; one pass over the tile feeds both reductions.
    m_new = jnp.maximum(m_sc[...], jnp.max(xm, axis=-1, keepdims=True))
    scale = jnp.exp(m_sc[...] - m_new)
    p_sum = jnp.sum(jnp.exp(xm - m_new), axis=-1, keepdims=True)
    s_sc[...] = scale * s_sc[...] + p_sum
    # Exactly one class tile contains each row's label; accumulate its logit.
    t_sc[...] = t_sc[...] + jnp.sum(
        jnp.where(col == labels, x, 0.0), axis=-1, keepdims=True)
    m_sc[...] = m_new

    @pl.when(k == pl.num_programs(1) - 1)
    def _finalize():
        lse = m_sc[...] + jnp.log(s_sc[...])
        valid = jnp.logical_and(labels >= 0, labels < num_classes)
        loss_ref[...] = jnp.where(valid, lse - t_sc[...], 0.0)


def cross_entropy_loss(logits, labels, *, tile_n=256, tile_c=2048):
    """logits: (N, C) float, labels: (N,) int -> scalar f32 mean CE loss."""
    n, c = logits.shape
    labels = labels.astype(jnp.int32)

    # Lane/sublane-aligned tile sizes, capped so a double-buffered f32 tile is
    # a few MiB (fits v5e/v6e/v7x scoped VMEM with pipelining headroom).
    tn = min(tile_n, _round_up(n, 8))
    tc = min(tile_c, _round_up(c, 128))
    n_pad = _round_up(n, tn)
    c_pad = _round_up(c, tc)

    logits_p = logits
    if (n_pad, c_pad) != (n, c):
        logits_p = jnp.pad(logits, ((0, n_pad - n), (0, c_pad - c)))
    labels_p = labels
    if n_pad != n:
        labels_p = jnp.pad(labels, (0, n_pad - n),
                           constant_values=_IGNORE_INDEX)
    labels2d = labels_p.reshape(n_pad, 1)

    grid = (n_pad // tn, c_pad // tc)
    kernel = functools.partial(_ce_kernel, num_classes=c, tile_c=tc)

    per_sample = pl.pallas_call(
        kernel,
        out_shape=jax.ShapeDtypeStruct((n_pad, 1), jnp.float32),
        grid_spec=pltpu.PrefetchScalarGridSpec(
            num_scalar_prefetch=0,
            grid=grid,
            in_specs=[
                pl.BlockSpec((tn, 1), lambda i, k: (i, 0)),    # labels (tiny)
                pl.BlockSpec((tn, tc), lambda i, k: (i, k)),   # logits tile
            ],
            out_specs=pl.BlockSpec((tn, 1), lambda i, k: (i, 0)),
            scratch_shapes=[pltpu.VMEM((tn, 1), jnp.float32)] * 3,
        ),
        compiler_params=pltpu.CompilerParams(
            dimension_semantics=("parallel", "arbitrary"),
            vmem_limit_bytes=32 * 1024 * 1024,
        ),
    )(labels2d, logits_p)

    # Mean over non-ignored samples (PyTorch 'mean' reduction semantics).
    valid = jnp.logical_and(labels >= 0, labels < c)
    count = jnp.maximum(jnp.sum(valid.astype(jnp.float32)), 1.0)
    return jnp.sum(per_sample) / count


def _reference(logits, labels):
    """Pure-JAX reference with ignore_index=-100 and mean reduction."""
    c = logits.shape[-1]
    lse = jax.scipy.special.logsumexp(logits.astype(jnp.float32), axis=-1)
    safe = jnp.clip(labels, 0, c - 1)
    tgt = jnp.take_along_axis(logits.astype(jnp.float32),
                              safe[:, None], axis=-1)[:, 0]
    valid = jnp.logical_and(labels >= 0, labels < c)
    per = jnp.where(valid, lse - tgt, 0.0)
    return jnp.sum(per) / jnp.maximum(jnp.sum(valid.astype(jnp.float32)), 1.0)


if __name__ == "__main__":
    key = jax.random.PRNGKey(0)
    k1, k2, k3, k4 = jax.random.split(key, 4)

    # Small shape consistent with the module: batch=8 samples, 32 classes.
    N, C = 8, 32
    logits = jax.random.normal(k1, (N, C), dtype=jnp.float32)
    labels = jax.random.randint(k2, (N,), 0, C, dtype=jnp.int32)

    loss = cross_entropy_loss(logits, labels)
    jax.block_until_ready(loss)
    assert jnp.allclose(loss, _reference(logits, labels),
                        atol=1e-5, rtol=1e-5), (loss, _reference(logits, labels))

    # Second check: multi-tile grid (batch + class tiling, padding, online LSE)
    # and ignore_index handling, using small override tiles.
    N2, C2 = 24, 300
    logits2 = jax.random.normal(k3, (N2, C2), dtype=jnp.float32)
    labels2 = jax.random.randint(k4, (N2,), 0, C2, dtype=jnp.int32)
    labels2 = labels2.at[3].set(_IGNORE_INDEX)   # exercise ignore_index
    loss2 = cross_entropy_loss(logits2, labels2, tile_n=8, tile_c=128)
    jax.block_until_ready(loss2)
    assert jnp.allclose(loss2, _reference(logits2, labels2),
                        atol=1e-5, rtol=1e-5), (loss2, _reference(logits2, labels2))

    print("KERNEL_OK")
</pallas_src>

<mosaic_0001>
module attributes {stable_mosaic.version = 11 : i64} {
  func.func @_ce_kernel(%arg0: i32, %arg1: i32, %arg2: memref<8x1xi32, #tpu.memory_space<vmem>>, %arg3: memref<8x128xf32, #tpu.memory_space<vmem>>, %arg4: memref<8x1xf32, #tpu.memory_space<vmem>>, %arg5: memref<8x1xf32, #tpu.memory_space<vmem>>, %arg6: memref<8x1xf32, #tpu.memory_space<vmem>>, %arg7: memref<8x1xf32, #tpu.memory_space<vmem>>) attributes {dimension_semantics = [#tpu.dimension_semantics<parallel>, #tpu.dimension_semantics<arbitrary>], iteration_bounds = array<i64: 1, 1>, scalar_prefetch = 0 : i64, scratch_operands = 3 : i64, tpu.core_type = #tpu.core_type<tc>, window_params = [{transform_indices = @transform_0, window_bounds = array<i64: 8, 1>}, {transform_indices = @transform_1, window_bounds = array<i64: 8, 128>}, {transform_indices = @transform_2, window_bounds = array<i64: 8, 1>}]} {
    %c0_i32 = arith.constant 0 : i32
    %0 = arith.cmpi eq, %arg1, %c0_i32 : i32
    %1 = arith.extui %0 : i1 to i32
    %c0_i32_0 = arith.constant 0 : i32
    %2 = arith.cmpi ne, %1, %c0_i32_0 : i32
    scf.if %2 {
      %cst_24 = arith.constant -1.000000e+30 : f32
      %42 = vector.broadcast %cst_24 : f32 to vector<8x1xf32>
      %c0_25 = arith.constant 0 : index
      %c0_26 = arith.constant 0 : index
      %43 = vector.load %arg5[%c0_25, %c0_26] : memref<8x1xf32, #tpu.memory_space<vmem>>, vector<8x1xf32>
      tpu.vector_store %arg5[%c0_25, %c0_26], %42 {strides = array<i32>} : memref<8x1xf32, #tpu.memory_space<vmem>>, vector<8x1xf32>,
      %cst_27 = arith.constant 0.000000e+00 : f32
      %44 = vector.broadcast %cst_27 : f32 to vector<8x1xf32>
      %c0_28 = arith.constant 0 : index
      %c0_29 = arith.constant 0 : index
      %45 = vector.load %arg6[%c0_28, %c0_29] : memref<8x1xf32, #tpu.memory_space<vmem>>, vector<8x1xf32>
      tpu.vector_store %arg6[%c0_28, %c0_29], %44 {strides = array<i32>} : memref<8x1xf32, #tpu.memory_space<vmem>>, vector<8x1xf32>,
      %cst_30 = arith.constant 0.000000e+00 : f32
      %46 = vector.broadcast %cst_30 : f32 to vector<8x1xf32>
      %c0_31 = arith.constant 0 : index
      %c0_32 = arith.constant 0 : index
      %47 = vector.load %arg7[%c0_31, %c0_32] : memref<8x1xf32, #tpu.memory_space<vmem>>, vector<8x1xf32>
      tpu.vector_store %arg7[%c0_31, %c0_32], %46 {strides = array<i32>} : memref<8x1xf32, #tpu.memory_space<vmem>>, vector<8x1xf32>,
    } else {
    }
    %c0 = arith.constant 0 : index
    %c0_1 = arith.constant 0 : index
    %3 = vector.load %arg2[%c0, %c0_1] : memref<8x1xi32, #tpu.memory_space<vmem>>, vector<8x1xi32>
    %c0_2 = arith.constant 0 : index
    %c0_3 = arith.constant 0 : index
    %4 = vector.load %arg3[%c0_2, %c0_3] : memref<8x128xf32, #tpu.memory_space<vmem>>, vector<8x128xf32>
    %5 = tpu.iota {dimensions = array<i32: 1>} : vector<8x128xi32>
    %c128_i32 = arith.constant 128 : i32
    %6 = arith.muli %arg1, %c128_i32 : i32
    %7 = vector.broadcast %6 : i32 to vector<8x128xi32>
    %8 = arith.addi %5, %7 : vector<8x128xi32>
    %c32_i32 = arith.constant 32 : i32
    %9 = vector.broadcast %c32_i32 : i32 to vector<8x128xi32>
    %10 = arith.cmpi slt, %8, %9 : vector<8x128xi32>
    %cst = arith.constant -1.000000e+30 : f32
    %11 = vector.broadcast %cst : f32 to vector<8x128xf32>
    %12 = arith.select %10, %4, %11 : vector<8x128xi1>, vector<8x128xf32>
    %c0_4 = arith.constant 0 : index
    %c0_5 = arith.constant 0 : index
    %13 = vector.load %arg5[%c0_4, %c0_5] : memref<8x1xf32, #tpu.memory_space<vmem>>, vector<8x1xf32>
    %cst_6 = arith.constant dense<0xFF800000> : vector<8xf32>
    %14 = vector.multi_reduction <maximumf>, %12, %cst_6 [1] : vector<8x128xf32> to vector<8xf32>
    %15 = vector.shape_cast %14 : vector<8xf32> to vector<8x1xf32>
    %16 = arith.maximumf %13, %15 : vector<8x1xf32>
    %c0_7 = arith.constant 0 : index
    %c0_8 = arith.constant 0 : index
    %17 = vector.load %arg5[%c0_7, %c0_8] : memref<8x1xf32, #tpu.memory_space<vmem>>, vector<8x1xf32>
    %18 = arith.subf %17, %16 : vector<8x1xf32>
    %19 = math.exp %18 : vector<8x1xf32>
    %20 = vector.broadcast %16 : vector<8x1xf32> to vector<8x128xf32>
    %21 = arith.subf %12, %20 : vector<8x128xf32>
    %22 = math.exp %21 : vector<8x128xf32>
    %cst_9 = arith.constant dense<0.000000e+00> : vector<8xf32>
    %23 = vector.multi_reduction <add>, %22, %cst_9 [1] : vector<8x128xf32> to vector<8xf32>
    %24 = vector.shape_cast %23 : vector<8xf32> to vector<8x1xf32>
    %c0_10 = arith.constant 0 : index
    %c0_11 = arith.constant 0 : index
    %25 = vector.load %arg6[%c0_10, %c0_11] : memref<8x1xf32, #tpu.memory_space<vmem>>, vector<8x1xf32>
    %26 = arith.mulf %19, %25 : vector<8x1xf32>
    %27 = arith.addf %26, %24 : vector<8x1xf32>
    %c0_12 = arith.constant 0 : index
    %c0_13 = arith.constant 0 : index
    %28 = vector.load %arg6[%c0_12, %c0_13] : memref<8x1xf32, #tpu.memory_space<vmem>>, vector<8x1xf32>
    tpu.vector_store %arg6[%c0_12, %c0_13], %27 {strides = array<i32>} : memref<8x1xf32, #tpu.memory_space<vmem>>, vector<8x1xf32>,
    %c0_14 = arith.constant 0 : index
    %c0_15 = arith.constant 0 : index
    %29 = vector.load %arg7[%c0_14, %c0_15] : memref<8x1xf32, #tpu.memory_space<vmem>>, vector<8x1xf32>
    %30 = vector.broadcast %3 : vector<8x1xi32> to vector<8x128xi32>
    %31 = arith.cmpi eq, %8, %30 : vector<8x128xi32>
    %cst_16 = arith.constant 0.000000e+00 : f32
    %32 = vector.broadcast %cst_16 : f32 to vector<8x128xf32>
    %33 = arith.select %31, %4, %32 : vector<8x128xi1>, vector<8x128xf32>
    %cst_17 = arith.constant dense<0.000000e+00> : vector<8xf32>
    %34 = vector.multi_reduction <add>, %33, %cst_17 [1] : vector<8x128xf32> to vector<8xf32>
    %35 = vector.shape_cast %34 : vector<8xf32> to vector<8x1xf32>
    %36 = arith.addf %29, %35 : vector<8x1xf32>
    %c0_18 = arith.constant 0 : index
    %c0_19 = arith.constant 0 : index
    %37 = vector.load %arg7[%c0_18, %c0_19] : memref<8x1xf32, #tpu.memory_space<vmem>>, vector<8x1xf32>
    tpu.vector_store %arg7[%c0_18, %c0_19], %36 {strides = array<i32>} : memref<8x1xf32, #tpu.memory_space<vmem>>, vector<8x1xf32>,
    %c0_20 = arith.constant 0 : index
    %c0_21 = arith.constant 0 : index
    %38 = vector.load %arg5[%c0_20, %c0_21] : memref<8x1xf32, #tpu.memory_space<vmem>>, vector<8x1xf32>
    tpu.vector_store %arg5[%c0_20, %c0_21], %16 {strides = array<i32>} : memref<8x1xf32, #tpu.memory_space<vmem>>, vector<8x1xf32>,
    %c0_i32_22 = arith.constant 0 : i32
    %39 = arith.cmpi eq, %arg1, %c0_i32_22 : i32
    %40 = arith.extui %39 : i1 to i32
    %c0_i32_23 = arith.constant 0 : i32
    %41 = arith.cmpi ne, %40, %c0_i32_23 : i32
    scf.if %41 {
      %c0_24 = arith.constant 0 : index
      %c0_25 = arith.constant 0 : index
      %42 = vector.load %arg5[%c0_24, %c0_25] : memref<8x1xf32, #tpu.memory_space<vmem>>, vector<8x1xf32>
      %c0_26 = arith.constant 0 : index
      %c0_27 = arith.constant 0 : index
      %43 = vector.load %arg6[%c0_26, %c0_27] : memref<8x1xf32, #tpu.memory_space<vmem>>, vector<8x1xf32>
      %44 = math.log %43 : vector<8x1xf32>
      %45 = arith.addf %42, %44 : vector<8x1xf32>
      %c0_i32_28 = arith.constant 0 : i32
      %46 = vector.broadcast %c0_i32_28 : i32 to vector<8x1xi32>
      %47 = arith.cmpi sge, %3, %46 : vector<8x1xi32>
      %c32_i32_29 = arith.constant 32 : i32
      %48 = vector.broadcast %c32_i32_29 : i32 to vector<8x1xi32>
      %49 = arith.cmpi slt, %3, %48 : vector<8x1xi32>
      %50 = arith.andi %47, %49 : vector<8x1xi1>
      %c0_30 = arith.constant 0 : index
      %c0_31 = arith.constant 0 : index
      %51 = vector.load %arg7[%c0_30, %c0_31] : memref<8x1xf32, #tpu.memory_space<vmem>>, vector<8x1xf32>
      %52 = arith.subf %45, %51 : vector<8x1xf32>
      %cst_32 = arith.constant 0.000000e+00 : f32
      %53 = vector.broadcast %cst_32 : f32 to vector<8x1xf32>
      %54 = arith.select %50, %52, %53 : vector<8x1xi1>, vector<8x1xf32>
      %c0_33 = arith.constant 0 : index
      %c0_34 = arith.constant 0 : index
      %55 = vector.load %arg4[%c0_33, %c0_34] : memref<8x1xf32, #tpu.memory_space<vmem>>, vector<8x1xf32>
      tpu.vector_store %arg4[%c0_33, %c0_34], %54 {strides = array<i32>} : memref<8x1xf32, #tpu.memory_space<vmem>>, vector<8x1xf32>,
    } else {
    }
    return
  }
  func.func @transform_0(%arg0: i32, %arg1: i32) -> (i32, i32) {
    %c0_i32 = arith.constant 0 : i32
    %c0_i32_0 = arith.constant 0 : i32
    return %arg0, %c0_i32 : i32, i32
  }
  func.func @transform_1(%arg0: i32, %arg1: i32) -> (i32, i32) {
    %c0_i32 = arith.constant 0 : i32
    return %arg0, %arg1 : i32, i32
  }
  func.func @transform_2(%arg0: i32, %arg1: i32) -> (i32, i32) {
    %c0_i32 = arith.constant 0 : i32
    %c0_i32_0 = arith.constant 0 : i32
    return %arg0, %c0_i32 : i32, i32
  }
}

</mosaic_0001>

<llo_original>
// kernel: tpu_custom_call.1
$region0: #{tpu_custom_call.1}
  #allocation0 [shape = 'u32[]', space=smem, size = 0x4, offset = 0x4, fixed_abs, tag = 'smem constant byte address 0x4 - core index']
  #allocation1 [shape = 'u32[144,128]{1,0:T(1,128)}', space=vmem, size = 0x12000, scoped, tag = 'internal scratch']
  #allocation2 [shape = 'f32[8,1]{1,0:T(8,128)}', space=vmem, size = 0x1000, scoped, tag = 'scratch operand']
  #allocation3 [shape = 'f32[8,1]{1,0:T(8,128)}', space=vmem, size = 0x1000, scoped, tag = 'scratch operand']
  #allocation4 [shape = 'f32[8,1]{1,0:T(8,128)}', space=vmem, size = 0x1000, scoped, tag = 'scratch operand']
  %s0 = inlined_call_operand.vmem [shape: s32[8,1], index: 0, kind: input, shape index: {}]
  %s1 = inlined_call_operand.vmem [shape: f32[8,128], index: 1, kind: input, shape index: {}]
  %s2 = inlined_call_operand.vmem [shape: f32[8,1], index: 2, kind: output, shape index: {}]
  %s3 = sld [smem:[#allocation0]]
  $region26: #{tpu_custom_call.1} parent=0
    _
  %s5 = ssub.s32 1, %s3
  %s6 = scalar_select 0, %s5, %s3
  // Predicated region
  $region2: #{tpu_custom_call.1} parent=0 // pred_check
    _
  $region3: #{tpu_custom_call.1} parent=0 // pred_check_branch
    %8 = sbr.rel (0) target = $region5
  $region4: #{tpu_custom_call.1} parent=0 // pred_region
    _
  $region5: #{tpu_custom_call.1} parent=0 // pred_fallthru
    _
  // Predicated region
  $region6: #{tpu_custom_call.1} parent=0 // pred_check
    _
  $region7: #{tpu_custom_call.1} parent=0 // pred_check_branch
    %10 = sbr.rel (0) target = $region9
  $region8: #{tpu_custom_call.1} parent=0 // pred_region
    _
  $region9: #{tpu_custom_call.1} parent=0 // pred_fallthru
    _
  %p11 = scmp.eq.s32.totalorder 0, 0
  // Predicated region
  $region10: #{tpu_custom_call.1} parent=0 // pred_check
    %p12 = pneg %p11
  $region11: #{tpu_custom_call.1} parent=0 // pred_check_branch
    %14 = sbr.rel (%p12) target = $region13
  $region12: #{tpu_custom_call.1} parent=0 // pred_region
    %vm15 = vcmask 7168
    %16 = vst.msk [vmem:[#allocation2] sm:$0xff] %vm15, -1e+30
    %17 = vst.msk [vmem:[#allocation3] sm:$0xff] %vm15, 0.0
    %18 = vst.msk [vmem:[#allocation4] sm:$0xff] %vm15, 0.0
  $region13: #{tpu_custom_call.1} parent=0 // pred_fallthru
    _
  %v19 = vld [vmem:[%s0] sm:$0xff]
  %v20 = vld [vmem:[%s1] sm:$0xff]
  %v21 = vlaneseq
  %v22 = vand.u32 %v21, 127
  %s23 = smul.u32 0, 128
  %v24 = vstv %s23
  %v25 = vadd.s32 %v22, %v24
  %vm26 = vcmp.lt.s32.totalorder %v25, 32
  %v27 = vsel %vm26, %v20, -1e+30
  %v28 = vld [vmem:[#allocation2] sm:$0xff]
  %29 = vmax.xlane.f32.xlu0 %v27
  %v30 = vpop.xlane.xlu0 %29
  %v31 = vmax.f32 %v28, %v30
  %v32 = vsub.f32 %v28, %v31
  %v33 = vmul.f32 %v32, 1.442695
  %v34 = vpow.pop %v33
  %36 = vset.pattern.permute.xlu0 0
  %37 = vperm.xlu0 %36, %v31
  %v38 = vpop.permute.xlu0 %37
  %v40 = vsub.f32 %v27, %v38
  %v41 = vmul.f32 %v40, 1.442695
  %v42 = vpow.pop %v41
  %43 = vadd.xlane.f32.xlu0 %v42
  %v44 = vpop.xlane.xlu0 %43
  %v45 = vld [vmem:[#allocation3] sm:$0xff]
  %v46 = vmul.f32 %v34, %v45
  %v47 = vadd.f32 %v46, %v44
  %vm48 = vcmask 7168
  %49 = vst.msk [vmem:[#allocation3] sm:$0xff] %vm48, %v47
  %v50 = vld [vmem:[#allocation4] sm:$0xff]
  %51 = vset.pattern.permute.xlu0 0
  %52 = vperm.xlu0 %51, %v19
  %v53 = vpop.permute.xlu0 %52
  %vm54 = vcmp.eq.s32.totalorder %v25, %v53
  %v55 = vsel %vm54, %v20, 0.0
  %56 = vadd.xlane.f32.xlu0 %v55
  %v57 = vpop.xlane.xlu0 %56
  %v58 = vadd.f32 %v50, %v57
  %59 = vst.msk [vmem:[#allocation4] sm:$0xff] %vm48, %v58
  %60 = vst.msk [vmem:[#allocation2] sm:$0xff] %vm48, %v31
  // Predicated region
  $region14: #{tpu_custom_call.1} parent=0 // pred_check
    %p61 = pneg %p11
  $region15: #{tpu_custom_call.1} parent=0 // pred_check_branch
    %63 = sbr.rel (%p61) target = $region17
  $region16: #{tpu_custom_call.1} parent=0 // pred_region
    %v64 = vld [vmem:[#allocation2] sm:$0xff]
    %v65 = vld [vmem:[#allocation3] sm:$0xff]
    %v66 = vlog2.pop %v65
    %v67 = vmul.f32 %v66, 0.6931472
    %v68 = vadd.f32 %v64, %v67
    %vm69 = vcmp.ge.s32.totalorder %v19, 0
    %vm70 = vcmp.lt.s32.totalorder %v19, 32
    %vm71 = vmand %vm69, %vm70
    %v72 = vld [vmem:[#allocation4] sm:$0xff]
    %v73 = vsub.f32 %v68, %v72
    %v74 = vsel %vm71, %v73, 0.0
    %75 = vst.msk [vmem:[%s2] sm:$0xff] %vm48, %v74
  $region17: #{tpu_custom_call.1} parent=0 // pred_fallthru
    _
  // Predicated region
  $region18: #{tpu_custom_call.1} parent=0 // pred_check
    _
  $region19: #{tpu_custom_call.1} parent=0 // pred_check_branch
    %77 = sbr.rel (0) target = $region21
  $region20: #{tpu_custom_call.1} parent=0 // pred_region
    _
  $region21: #{tpu_custom_call.1} parent=0 // pred_fallthru
    _
  // Predicated region
  $region22: #{tpu_custom_call.1} parent=0 // pred_check
    _
  $region23: #{tpu_custom_call.1} parent=0 // pred_check_branch
    %79 = sbr.rel (0) target = $region25
  $region24: #{tpu_custom_call.1} parent=0 // pred_region
    _
  $region25: #{tpu_custom_call.1} parent=0 // pred_fallthru
    _

</llo_original>
